<compile_context>
chip_gen: v5e
topology: v5e:2x2
jax: 0.10.0
libtpu: 0.0.40
codegen_flags: <defaults>
</compile_context>

<pallas_src>
import math

import jax
import jax.numpy as jnp
from jax.experimental import pallas as pl
from jax.experimental.pallas import tpu as pltpu

_LANE = 128            # last dims padded to multiples of this (vreg lane width)
_SUBLANE = 8           # second-to-last dims padded to multiples of this (sublane width)
_PALLAS_MIN_BATCH = 64  # below this, plain XLA is faster than pad + launch + slice


def _round_up(n, m):
    return ((n + m - 1) // m) * m


def _cdiv(a, b):
    return -(-a // b)


def _actor_kernel(x_ref, w1_ref, b1_ref, w2_ref, b2_ref, w3_ref, b3_ref, o_ref):
    """One batch tile of: tanh(relu(relu(x@W1+b1)@W2+b2)@W3+b3).

    Weights are [in, out] (transposed vs PyTorch) so each layer is x @ W on the MXU.
    x arrives already in the weight dtype (bf16); accumulation is f32 and all
    element-wise math (bias, relu, tanh) stays f32.
    """
    x = x_ref[...]                                            # bf16, no per-tile cast
    h1 = jnp.dot(x, w1_ref[...], preferred_element_type=jnp.float32) + b1_ref[...]
    h1 = jnp.maximum(h1, 0.0)
    h2 = jnp.dot(h1.astype(w2_ref.dtype), w2_ref[...],
                 preferred_element_type=jnp.float32) + b2_ref[...]
    h2 = jnp.maximum(h2, 0.0)
    h3 = jnp.dot(h2.astype(w3_ref.dtype), w3_ref[...],      # w3 kept f32 (tiny layer)
                 preferred_element_type=jnp.float32) + b3_ref[...]
    o_ref[...] = jnp.tanh(h3).astype(o_ref.dtype)


def _vmem_limit_bytes(tm, in_pad, hid_pad, out_pad, params, x_itemsize):
    # Buffered(1) weights -> one resident copy each; x/out tiles double-buffered.
    w_bytes = sum(int(a.size) * a.dtype.itemsize for a in params)
    x_bytes = 2 * tm * in_pad * x_itemsize
    o_bytes = 2 * tm * out_pad * 4
    h_bytes = 2 * tm * max(hid_pad, out_pad) * 4              # f32 h1/h2/h3 live values
    need = w_bytes + x_bytes + o_bytes + h_bytes
    # 25% headroom; floor at the common scoped default, cap well under v7x's 64 MiB.
    return int(min(max(need * 5 // 4, 32 << 20), 48 << 20))


def _pallas_forward(x, params, tm, n_tiles, out_pad, vmem_limit, weight_buffer_count):
    w1, b1, w2, b2, w3, b3 = params
    b_pad, in_pad = x.shape

    if weight_buffer_count is not None and hasattr(pl, "Buffered"):
        def w_spec(a):  # VMEM-resident, single-buffered (constant index_map)
            return pl.BlockSpec(a.shape, lambda i: (0, 0),
                                pipeline_mode=pl.Buffered(weight_buffer_count))
    else:
        def w_spec(a):
            return pl.BlockSpec(a.shape, lambda i: (0, 0))

    return pl.pallas_call(
        _actor_kernel,
        out_shape=jax.ShapeDtypeStruct((b_pad, out_pad), jnp.float32),
        grid=(n_tiles,),
        in_specs=[pl.BlockSpec((tm, in_pad), lambda i: (i, 0)),
                  w_spec(w1), w_spec(b1), w_spec(w2), w_spec(b2),
                  w_spec(w3), w_spec(b3)],
        out_specs=pl.BlockSpec((tm, out_pad), lambda i: (i, 0)),
        compiler_params=pltpu.CompilerParams(
            dimension_semantics=("parallel",),        # v7x: batch tiles across 2 TCs
            vmem_limit_bytes=vmem_limit),
    )(x, w1, b1, w2, b2, w3, b3)


def _actor_forward_xla(state, params, output_dim):
    """Small-batch fast path: fused XLA matmul chain (same numerics as the kernel)."""
    w1, b1, w2, b2, w3, b3 = params
    in_dim = state.shape[1]
    x = state.astype(w1.dtype)
    if in_dim != w1.shape[0]:
        x = jnp.pad(x, ((0, 0), (0, w1.shape[0] - in_dim)))
    h = jnp.maximum(jnp.dot(x, w1, preferred_element_type=jnp.float32) + b1, 0.0)
    h = jnp.maximum(jnp.dot(h.astype(w2.dtype), w2,
                            preferred_element_type=jnp.float32) + b2, 0.0)
    y = jnp.tanh(jnp.dot(h.astype(w3.dtype), w3,
                         preferred_element_type=jnp.float32) + b3)
    return y[:, :output_dim]


def actor_forward(state, params, output_dim, *, block_b=512, force_pallas=False):
    """state: [B, input_dim] f32.  Returns [B, output_dim] f32."""
    w1, b1, w2, b2, w3, b3 = params               # already lane-padded by init
    B, in_dim = state.shape
    in_pad, hid_pad = w1.shape
    out_pad = w3.shape[1]

    if not force_pallas and B < _PALLAS_MIN_BATCH:
        return _actor_forward_xla(state, params, output_dim)

    # Balanced batch tiling: worst-case pad < 8 rows per tile.
    n_tiles = _cdiv(B, block_b)
    tm = _round_up(_cdiv(B, n_tiles), _SUBLANE)
    # v7x megacore: make sure both TensorCores get at least one tile when possible.
    if n_tiles == 1 and B >= 2 * _SUBLANE:
        n_tiles = 2
        tm = _round_up(_cdiv(B, n_tiles), _SUBLANE)
    b_pad = n_tiles * tm

    # Pad AND cast to the weight dtype in one materialized copy -> streamed x tiles
    # are bf16 (half the HBM->VMEM bytes) and the kernel needs no per-tile cast.
    if (b_pad, in_pad) != (B, in_dim) or state.dtype != w1.dtype:
        x = jnp.zeros((b_pad, in_pad), w1.dtype).at[:B, :in_dim].set(
            state.astype(w1.dtype))
    else:
        x = state

    vmem_limit = _vmem_limit_bytes(tm, in_pad, hid_pad, out_pad, params,
                                   jnp.dtype(w1.dtype).itemsize)

    # pipeline_mode=pl.Buffered(1) is the preferred path (single VMEM copy of each
    # resident weight); fall back to default double-buffering if unsupported.
    try:
        out = _pallas_forward(x, params, tm, n_tiles, out_pad, vmem_limit, 1)
        out = jax.block_until_ready(out)   # surface lowering/runtime errors here
    except Exception:
        out = _pallas_forward(x, params, tm, n_tiles, out_pad, vmem_limit, None)
    return out[:B, :output_dim]


def init_actor_params(key, input_dim, output_dim, hidden_dim, init_w=0.003,
                      weight_dtype=jnp.bfloat16, last_layer_dtype=jnp.float32):
    """nn.Linear default init + uniform(-init_w, init_w) on the last layer,
    zero-padded to TPU-friendly (lane-dense) shapes.  Biases stay f32; the tiny
    last-layer weight stays f32 to avoid bf16 quantization of its small values."""
    in_p = _round_up(input_dim, _LANE)
    hid_p = _round_up(hidden_dim, _LANE)
    out_p = _round_up(output_dim, _LANE)

    k1, k2, k3, k4, k5, k6 = jax.random.split(key, 6)

    def linear(kw, kb, fan_in, fan_out, fi_p, fo_p, w_bound, b_bound, w_dtype):
        w = jax.random.uniform(kw, (fan_in, fan_out), jnp.float32, -w_bound, w_bound)
        b = jax.random.uniform(kb, (1, fan_out), jnp.float32, -b_bound, b_bound)
        w_p = jnp.zeros((fi_p, fo_p), jnp.float32).at[:fan_in, :fan_out].set(w)
        b_p = jnp.zeros((1, fo_p), jnp.float32).at[:, :fan_out].set(b)
        return w_p.astype(w_dtype), b_p

    bound1 = 1.0 / math.sqrt(input_dim)
    bound2 = 1.0 / math.sqrt(hidden_dim)
    w1, b1 = linear(k1, k2, input_dim, hidden_dim, in_p, hid_p, bound1, bound1, weight_dtype)
    w2, b2 = linear(k3, k4, hidden_dim, hidden_dim, hid_p, hid_p, bound2, bound2, weight_dtype)
    w3, b3 = linear(k5, k6, hidden_dim, output_dim, hid_p, out_p, init_w, init_w, last_layer_dtype)
    return (w1, b1, w2, b2, w3, b3)


def actor_forward_ref(state, params, output_dim):
    """Pure-JAX f32 reference over the same padded params."""
    w1, b1, w2, b2, w3, b3 = params
    B, in_dim = state.shape
    x = jnp.zeros((B, w1.shape[0]), jnp.float32).at[:, :in_dim].set(state)
    h = jnp.maximum(x @ w1.astype(jnp.float32) + b1, 0.0)
    h = jnp.maximum(h @ w2.astype(jnp.float32) + b2, 0.0)
    y = jnp.tanh(h @ w3.astype(jnp.float32) + b3)
    return y[:, :output_dim]


# TODO(synk): select_action / sample_action / evaluate_action are host-side sampling
# utilities (Normal noise + clamp), not part of the forward graph; intentionally
# left out of the kernel.

if __name__ == "__main__":
    input_dim, output_dim, hidden_dim = 16, 8, 32

    key = jax.random.PRNGKey(0)
    k_state, k_big, k_params = jax.random.split(key, 3)
    params = init_actor_params(k_params, input_dim, output_dim, hidden_dim)

    # 1) Small batch, force the Pallas path (normally dispatched to plain XLA).
    state = jax.random.normal(k_state, (8, input_dim), jnp.float32)
    out = jax.block_until_ready(actor_forward(state, params, output_dim, force_pallas=True))
    ref = actor_forward_ref(state, params, output_dim)
    assert out.shape == (8, output_dim)
    err = jnp.max(jnp.abs(out - ref))
    assert jnp.allclose(out, ref, atol=2e-2, rtol=2e-2), f"small-batch max abs err {err}"

    # 2) Larger, awkward batch: exercises balanced tiling and >=2 grid steps.
    state_big = jax.random.normal(k_big, (200, input_dim), jnp.float32)
    out_big = jax.block_until_ready(actor_forward(state_big, params, output_dim))
    ref_big = actor_forward_ref(state_big, params, output_dim)
    assert out_big.shape == (200, output_dim)
    err_big = jnp.max(jnp.abs(out_big - ref_big))
    assert jnp.allclose(out_big, ref_big, atol=2e-2, rtol=2e-2), f"large-batch max abs err {err_big}"

    # 3) Tiny-batch XLA fast path agrees as well.
    out_tiny = jax.block_until_ready(actor_forward(state[:2], params, output_dim))
    assert jnp.allclose(out_tiny, ref[:2], atol=2e-2, rtol=2e-2)

    print("KERNEL_OK")
</pallas_src>

<mosaic_0001>
module attributes {stable_mosaic.version = 11 : i64} {
  func.func @_actor_kernel(%arg0: i32, %arg1: memref<8x128xbf16, #tpu.memory_space<vmem>>, %arg2: memref<128x128xbf16, #tpu.memory_space<vmem>>, %arg3: memref<1x128xf32, #tpu.memory_space<vmem>>, %arg4: memref<128x128xbf16, #tpu.memory_space<vmem>>, %arg5: memref<1x128xf32, #tpu.memory_space<vmem>>, %arg6: memref<128x128xf32, #tpu.memory_space<vmem>>, %arg7: memref<1x128xf32, #tpu.memory_space<vmem>>, %arg8: memref<8x128xf32, #tpu.memory_space<vmem>>) attributes {dimension_semantics = [#tpu.dimension_semantics<parallel>], iteration_bounds = array<i64: 1>, scalar_prefetch = 0 : i64, scratch_operands = 0 : i64, tpu.core_type = #tpu.core_type<tc>, window_params = [{transform_indices = @transform_0, window_bounds = array<i64: 8, 128>}, {pipeline_mode = #tpu.pipeline_mode<synchronous>, transform_indices = @transform_1, window_bounds = array<i64: 128, 128>}, {pipeline_mode = #tpu.pipeline_mode<synchronous>, transform_indices = @transform_2, window_bounds = array<i64: 1, 128>}, {pipeline_mode = #tpu.pipeline_mode<synchronous>, transform_indices = @transform_3, window_bounds = array<i64: 128, 128>}, {pipeline_mode = #tpu.pipeline_mode<synchronous>, transform_indices = @transform_4, window_bounds = array<i64: 1, 128>}, {pipeline_mode = #tpu.pipeline_mode<synchronous>, transform_indices = @transform_5, window_bounds = array<i64: 128, 128>}, {pipeline_mode = #tpu.pipeline_mode<synchronous>, transform_indices = @transform_6, window_bounds = array<i64: 1, 128>}, {transform_indices = @transform_7, window_bounds = array<i64: 8, 128>}]} {
    %c0 = arith.constant 0 : index
    %c0_0 = arith.constant 0 : index
    %0 = vector.load %arg1[%c0, %c0_0] : memref<8x128xbf16, #tpu.memory_space<vmem>>, vector<8x128xbf16>
    %c0_1 = arith.constant 0 : index
    %c0_2 = arith.constant 0 : index
    %1 = vector.load %arg2[%c0_1, %c0_2] : memref<128x128xbf16, #tpu.memory_space<vmem>>, vector<128x128xbf16>
    %cst = arith.constant dense<0.000000e+00> : vector<8x128xf32>
    %2 = tpu.matmul %0, %1, %cst {dimension_numbers = #tpu.dot_dimension_numbers<[1], [0], [0], [1], [0, 0, 1, 1], [], []>} : vector<8x128xbf16>, vector<128x128xbf16>, vector<8x128xf32> -> vector<8x128xf32>
    %c0_3 = arith.constant 0 : index
    %c0_4 = arith.constant 0 : index
    %3 = vector.load %arg3[%c0_3, %c0_4] : memref<1x128xf32, #tpu.memory_space<vmem>>, vector<1x128xf32>
    %4 = vector.broadcast %3 : vector<1x128xf32> to vector<8x128xf32>
    %5 = arith.addf %2, %4 : vector<8x128xf32>
    %cst_5 = arith.constant 0.000000e+00 : f32
    %6 = vector.broadcast %cst_5 : f32 to vector<8x128xf32>
    %7 = arith.maximumf %5, %6 : vector<8x128xf32>
    %8 = arith.truncf %7 : vector<8x128xf32> to vector<8x128xbf16>
    %c0_6 = arith.constant 0 : index
    %c0_7 = arith.constant 0 : index
    %9 = vector.load %arg4[%c0_6, %c0_7] : memref<128x128xbf16, #tpu.memory_space<vmem>>, vector<128x128xbf16>
    %cst_8 = arith.constant dense<0.000000e+00> : vector<8x128xf32>
    %10 = tpu.matmul %8, %9, %cst_8 {dimension_numbers = #tpu.dot_dimension_numbers<[1], [0], [0], [1], [0, 0, 1, 1], [], []>} : vector<8x128xbf16>, vector<128x128xbf16>, vector<8x128xf32> -> vector<8x128xf32>
    %c0_9 = arith.constant 0 : index
    %c0_10 = arith.constant 0 : index
    %11 = vector.load %arg5[%c0_9, %c0_10] : memref<1x128xf32, #tpu.memory_space<vmem>>, vector<1x128xf32>
    %12 = vector.broadcast %11 : vector<1x128xf32> to vector<8x128xf32>
    %13 = arith.addf %10, %12 : vector<8x128xf32>
    %cst_11 = arith.constant 0.000000e+00 : f32
    %14 = vector.broadcast %cst_11 : f32 to vector<8x128xf32>
    %15 = arith.maximumf %13, %14 : vector<8x128xf32>
    %c0_12 = arith.constant 0 : index
    %c0_13 = arith.constant 0 : index
    %16 = vector.load %arg6[%c0_12, %c0_13] : memref<128x128xf32, #tpu.memory_space<vmem>>, vector<128x128xf32>
    %cst_14 = arith.constant dense<0.000000e+00> : vector<8x128xf32>
    %17 = tpu.matmul %15, %16, %cst_14 {dimension_numbers = #tpu.dot_dimension_numbers<[1], [0], [0], [1], [0, 0, 1, 1], [], []>} : vector<8x128xf32>, vector<128x128xf32>, vector<8x128xf32> -> vector<8x128xf32>
    %c0_15 = arith.constant 0 : index
    %c0_16 = arith.constant 0 : index
    %18 = vector.load %arg7[%c0_15, %c0_16] : memref<1x128xf32, #tpu.memory_space<vmem>>, vector<1x128xf32>
    %19 = vector.broadcast %18 : vector<1x128xf32> to vector<8x128xf32>
    %20 = arith.addf %17, %19 : vector<8x128xf32>
    %21 = math.tanh %20 : vector<8x128xf32>
    %c0_17 = arith.constant 0 : index
    %c0_18 = arith.constant 0 : index
    %22 = vector.load %arg8[%c0_17, %c0_18] : memref<8x128xf32, #tpu.memory_space<vmem>>, vector<8x128xf32>
    tpu.vector_store %arg8[%c0_17, %c0_18], %21 {strides = array<i32>} : memref<8x128xf32, #tpu.memory_space<vmem>>, vector<8x128xf32>,
    return
  }
  func.func @transform_0(%arg0: i32) -> (i32, i32) {
    %c0_i32 = arith.constant 0 : i32
    %c0_i32_0 = arith.constant 0 : i32
    return %arg0, %c0_i32 : i32, i32
  }
  func.func @transform_1(%arg0: i32) -> (i32, i32) {
    %c0_i32 = arith.constant 0 : i32
    %c0_i32_0 = arith.constant 0 : i32
    %c0_i32_1 = arith.constant 0 : i32
    return %c0_i32, %c0_i32_0 : i32, i32
  }
  func.func @transform_2(%arg0: i32) -> (i32, i32) {
    %c0_i32 = arith.constant 0 : i32
    %c0_i32_0 = arith.constant 0 : i32
    %c0_i32_1 = arith.constant 0 : i32
    return %c0_i32, %c0_i32_0 : i32, i32
  }
  func.func @transform_3(%arg0: i32) -> (i32, i32) {
    %c0_i32 = arith.constant 0 : i32
    %c0_i32_0 = arith.constant 0 : i32
    %c0_i32_1 = arith.constant 0 : i32
    return %c0_i32, %c0_i32_0 : i32, i32
  }
  func.func @transform_4(%arg0: i32) -> (i32, i32) {
    %c0_i32 = arith.constant 0 : i32
    %c0_i32_0 = arith.constant 0 : i32
    %c0_i32_1 = arith.constant 0 : i32
    return %c0_i32, %c0_i32_0 : i32, i32
  }
  func.func @transform_5(%arg0: i32) -> (i32, i32) {
    %c0_i32 = arith.constant 0 : i32
    %c0_i32_0 = arith.constant 0 : i32
    %c0_i32_1 = arith.constant 0 : i32
    return %c0_i32, %c0_i32_0 : i32, i32
  }
  func.func @transform_6(%arg0: i32) -> (i32, i32) {
    %c0_i32 = arith.constant 0 : i32
    %c0_i32_0 = arith.constant 0 : i32
    %c0_i32_1 = arith.constant 0 : i32
    return %c0_i32, %c0_i32_0 : i32, i32
  }
  func.func @transform_7(%arg0: i32) -> (i32, i32) {
    %c0_i32 = arith.constant 0 : i32
    %c0_i32_0 = arith.constant 0 : i32
    return %arg0, %c0_i32 : i32, i32
  }
}

module attributes {stable_mosaic.version = 11 : i64} {
  func.func @_actor_kernel(%arg0: i32, %arg1: memref<8x128xbf16, #tpu.memory_space<vmem>>, %arg2: memref<128x128xbf16, #tpu.memory_space<vmem>>, %arg3: memref<1x128xf32, #tpu.memory_space<vmem>>, %arg4: memref<128x128xbf16, #tpu.memory_space<vmem>>, %arg5: memref<1x128xf32, #tpu.memory_space<vmem>>, %arg6: memref<128x128xf32, #tpu.memory_space<vmem>>, %arg7: memref<1x128xf32, #tpu.memory_space<vmem>>, %arg8: memref<8x128xf32, #tpu.memory_space<vmem>>) attributes {dimension_semantics = [#tpu.dimension_semantics<parallel>], iteration_bounds = array<i64: 1>, scalar_prefetch = 0 : i64, scratch_operands = 0 : i64, tpu.core_type = #tpu.core_type<tc>, window_params = [{transform_indices = @transform_0, window_bounds = array<i64: 8, 128>}, {pipeline_mode = #tpu.pipeline_mode<synchronous>, transform_indices = @transform_1, window_bounds = array<i64: 128, 128>}, {pipeline_mode = #tpu.pipeline_mode<synchronous>, transform_indices = @transform_2, window_bounds = array<i64: 1, 128>}, {pipeline_mode = #tpu.pipeline_mode<synchronous>, transform_indices = @transform_3, window_bounds = array<i64: 128, 128>}, {pipeline_mode = #tpu.pipeline_mode<synchronous>, transform_indices = @transform_4, window_bounds = array<i64: 1, 128>}, {pipeline_mode = #tpu.pipeline_mode<synchronous>, transform_indices = @transform_5, window_bounds = array<i64: 128, 128>}, {pipeline_mode = #tpu.pipeline_mode<synchronous>, transform_indices = @transform_6, window_bounds = array<i64: 1, 128>}, {transform_indices = @transform_7, window_bounds = array<i64: 8, 128>}]} {
    %c0 = arith.constant 0 : index
    %c0_0 = arith.constant 0 : index
    %0 = vector.load %arg1[%c0, %c0_0] : memref<8x128xbf16, #tpu.memory_space<vmem>>, vector<8x128xbf16>
    %c0_1 = arith.constant 0 : index
    %c0_2 = arith.constant 0 : index
    %1 = vector.load %arg2[%c0_1, %c0_2] : memref<128x128xbf16, #tpu.memory_space<vmem>>, vector<128x128xbf16>
    %cst = arith.constant dense<0.000000e+00> : vector<8x128xf32>
    %2 = tpu.matmul %0, %1, %cst {dimension_numbers = #tpu.dot_dimension_numbers<[1], [0], [0], [1], [0, 0, 1, 1], [], []>} : vector<8x128xbf16>, vector<128x128xbf16>, vector<8x128xf32> -> vector<8x128xf32>
    %c0_3 = arith.constant 0 : index
    %c0_4 = arith.constant 0 : index
    %3 = vector.load %arg3[%c0_3, %c0_4] : memref<1x128xf32, #tpu.memory_space<vmem>>, vector<1x128xf32>
    %4 = vector.broadcast %3 : vector<1x128xf32> to vector<8x128xf32>
    %5 = arith.addf %2, %4 : vector<8x128xf32>
    %cst_5 = arith.constant 0.000000e+00 : f32
    %6 = vector.broadcast %cst_5 : f32 to vector<8x128xf32>
    %7 = arith.maximumf %5, %6 : vector<8x128xf32>
    %8 = arith.truncf %7 : vector<8x128xf32> to vector<8x128xbf16>
    %c0_6 = arith.constant 0 : index
    %c0_7 = arith.constant 0 : index
    %9 = vector.load %arg4[%c0_6, %c0_7] : memref<128x128xbf16, #tpu.memory_space<vmem>>, vector<128x128xbf16>
    %cst_8 = arith.constant dense<0.000000e+00> : vector<8x128xf32>
    %10 = tpu.matmul %8, %9, %cst_8 {dimension_numbers = #tpu.dot_dimension_numbers<[1], [0], [0], [1], [0, 0, 1, 1], [], []>} : vector<8x128xbf16>, vector<128x128xbf16>, vector<8x128xf32> -> vector<8x128xf32>
    %c0_9 = arith.constant 0 : index
    %c0_10 = arith.constant 0 : index
    %11 = vector.load %arg5[%c0_9, %c0_10] : memref<1x128xf32, #tpu.memory_space<vmem>>, vector<1x128xf32>
    %12 = vector.broadcast %11 : vector<1x128xf32> to vector<8x128xf32>
    %13 = arith.addf %10, %12 : vector<8x128xf32>
    %cst_11 = arith.constant 0.000000e+00 : f32
    %14 = vector.broadcast %cst_11 : f32 to vector<8x128xf32>
    %15 = arith.maximumf %13, %14 : vector<8x128xf32>
    %c0_12 = arith.constant 0 : index
    %c0_13 = arith.constant 0 : index
    %16 = vector.load %arg6[%c0_12, %c0_13] : memref<128x128xf32, #tpu.memory_space<vmem>>, vector<128x128xf32>
    %cst_14 = arith.constant dense<0.000000e+00> : vector<8x128xf32>
    %17 = tpu.matmul %15, %16, %cst_14 {dimension_numbers = #tpu.dot_dimension_numbers<[1], [0], [0], [1], [0, 0, 1, 1], [], []>} : vector<8x128xf32>, vector<128x128xf32>, vector<8x128xf32> -> vector<8x128xf32>
    %c0_15 = arith.constant 0 : index
    %c0_16 = arith.constant 0 : index
    %18 = vector.load %arg7[%c0_15, %c0_16] : memref<1x128xf32, #tpu.memory_space<vmem>>, vector<1x128xf32>
    %19 = vector.broadcast %18 : vector<1x128xf32> to vector<8x128xf32>
    %20 = arith.addf %17, %19 : vector<8x128xf32>
    %21 = math.tanh %20 : vector<8x128xf32>
    %c0_17 = arith.constant 0 : index
    %c0_18 = arith.constant 0 : index
    %22 = vector.load %arg8[%c0_17, %c0_18] : memref<8x128xf32, #tpu.memory_space<vmem>>, vector<8x128xf32>
    tpu.vector_store %arg8[%c0_17, %c0_18], %21 {strides = array<i32>} : memref<8x128xf32, #tpu.memory_space<vmem>>, vector<8x128xf32>,
    return
  }
  func.func @transform_0(%arg0: i32) -> (i32, i32) {
    %c0_i32 = arith.constant 0 : i32
    %c0_i32_0 = arith.constant 0 : i32
    return %arg0, %c0_i32 : i32, i32
  }
  func.func @transform_1(%arg0: i32) -> (i32, i32) {
    %c0_i32 = arith.constant 0 : i32
    %c0_i32_0 = arith.constant 0 : i32
    %c0_i32_1 = arith.constant 0 : i32
    return %c0_i32, %c0_i32_0 : i32, i32
  }
  func.func @transform_2(%arg0: i32) -> (i32, i32) {
    %c0_i32 = arith.constant 0 : i32
    %c0_i32_0 = arith.constant 0 : i32
    %c0_i32_1 = arith.constant 0 : i32
    return %c0_i32, %c0_i32_0 : i32, i32
  }
  func.func @transform_3(%arg0: i32) -> (i32, i32) {
    %c0_i32 = arith.constant 0 : i32
    %c0_i32_0 = arith.constant 0 : i32
    %c0_i32_1 = arith.constant 0 : i32
    return %c0_i32, %c0_i32_0 : i32, i32
  }
  func.func @transform_4(%arg0: i32) -> (i32, i32) {
    %c0_i32 = arith.constant 0 : i32
    %c0_i32_0 = arith.constant 0 : i32
    %c0_i32_1 = arith.constant 0 : i32
    return %c0_i32, %c0_i32_0 : i32, i32
  }
  func.func @transform_5(%arg0: i32) -> (i32, i32) {
    %c0_i32 = arith.constant 0 : i32
    %c0_i32_0 = arith.constant 0 : i32
    %c0_i32_1 = arith.constant 0 : i32
    return %c0_i32, %c0_i32_0 : i32, i32
  }
  func.func @transform_6(%arg0: i32) -> (i32, i32) {
    %c0_i32 = arith.constant 0 : i32
    %c0_i32_0 = arith.constant 0 : i32
    %c0_i32_1 = arith.constant 0 : i32
    return %c0_i32, %c0_i32_0 : i32, i32
  }
  func.func @transform_7(%arg0: i32) -> (i32, i32) {
    %c0_i32 = arith.constant 0 : i32
    %c0_i32_0 = arith.constant 0 : i32
    return %arg0, %c0_i32 : i32, i32
  }
}

</mosaic_0001>

<llo_original>
// kernel: tpu_custom_call.1
$region0: #{tpu_custom_call.1}
  #allocation0 [shape = 'u32[]', space=smem, size = 0x4, offset = 0x4, fixed_abs, tag = 'smem constant byte address 0x4 - core index']
  #allocation1 [shape = 'u32[72,128]{1,0:T(1,128)}', space=vmem, size = 0x9000, scoped, tag = 'internal scratch']
  %s0 = inlined_call_operand.hbm [shape: bf16[8,128], index: 0, kind: input, shape index: {}]
  %s1 = inlined_call_operand.hbm [shape: bf16[128,128], index: 1, kind: input, shape index: {}]
  %s2 = inlined_call_operand.vmem [shape: f32[1,128], index: 2, kind: input, shape index: {}]
  %s3 = inlined_call_operand.hbm [shape: bf16[128,128], index: 3, kind: input, shape index: {}]
  %s4 = inlined_call_operand.vmem [shape: f32[1,128], index: 4, kind: input, shape index: {}]
  %s5 = inlined_call_operand.hbm [shape: f32[128,128], index: 5, kind: input, shape index: {}]
  %s6 = inlined_call_operand.vmem [shape: f32[1,128], index: 6, kind: input, shape index: {}]
  %s7 = inlined_call_operand.hbm [shape: f32[8,128], index: 7, kind: output, shape index: {}]
  %s8 = sld [smem:[#allocation0]]
  $region54: #{tpu_custom_call.1} parent=0
    _
  %s10 = ssub.s32 1, %s8
  %s11 = scalar_select 0, %s10, %s8
  $region1: #{tpu_custom_call.1} parent=0
    #allocation2 [shape = 'u8[2048]{0}', space=vmem, size = 0x800, scoped, tag = 'input window, operand 0, single buffered']
    #allocation3 [shape = 's32[1]{0}', space=sflag, size = 0x4, scoped, tag = 'scoped memory for tpu_custom_call.1']
    #allocation4 [shape = 's32[1]{0}', space=sflag, size = 0x4, scoped, tag = 'scoped memory for tpu_custom_call.1']
    #allocation5 [shape = 'u8[32768]{0}', space=vmem, size = 0x8000, scoped, tag = 'input window, operand 1, single buffered']
    #allocation6 [shape = 's32[1]{0}', space=sflag, size = 0x4, scoped, tag = 'scoped memory for tpu_custom_call.1']
    #allocation7 [shape = 'u8[32768]{0}', space=vmem, size = 0x8000, scoped, tag = 'input window, operand 3, single buffered']
    #allocation8 [shape = 'u8[65536]{0}', space=vmem, size = 0x10000, scoped, tag = 'input window, operand 5, single buffered']
    #allocation9 [shape = 's32[1]{0}', space=sflag, size = 0x4, scoped, tag = 'scoped memory for tpu_custom_call.1']
    #allocation10 [shape = 'u8[4096]{0}', space=vmem, size = 0x1000, scoped, tag = 'output window, operand 0, single buffered']
    %12 = vsyncpa [#allocation3], 0
    %13 = vsyncpa [#allocation6], 0
    %14 = vsyncpa [#allocation9], 0
    %15 = vsyncpa [#allocation4], 0
    // Predicated region
    $region2: #{tpu_custom_call.1} parent=1 // pred_check
      _
    $region3: #{tpu_custom_call.1} parent=1 // pred_check_branch
      %17 = sbr.rel (0) target = $region5
    $region4: #{tpu_custom_call.1} parent=1 // pred_region
      %19 = vsyncadd [#allocation3], 0
      %s21 = sshll.u32 %s0, 4
      %s22 = int_to_ptr.hbm [resolvable:$true] %s21
      %s23 = sshll.u32 [#allocation2], 4
      %s24 = int_to_ptr.vmem [resolvable:$true] %s23
      %26 = dma.hbm_to_vmem [thread:$0]  %s22, 64, %s24, [#allocation3]
    $region5: #{tpu_custom_call.1} parent=1 // pred_fallthru
      _
    // Predicated region
    $region6: #{tpu_custom_call.1} parent=1 // pred_check
      _
    $region7: #{tpu_custom_call.1} parent=1 // pred_check_branch
      %28 = sbr.rel (0) target = $region9
    $region8: #{tpu_custom_call.1} parent=1 // pred_region
      %30 = vsyncadd [#allocation6], 0
      %s31 = sshll.u32 %s1, 4
      %s32 = int_to_ptr.hbm [resolvable:$true] %s31
      %s33 = sshll.u32 [#allocation5], 4
      %s34 = int_to_ptr.vmem [resolvable:$true] %s33
      %39 = dma.hbm_to_vmem [thread:$0]  %s32, 1024, %s34, [#allocation6], 64, 64, 4
    $region9: #{tpu_custom_call.1} parent=1 // pred_fallthru
      _
    // Predicated region
    $region10: #{tpu_custom_call.1} parent=1 // pred_check
      _
    $region11: #{tpu_custom_call.1} parent=1 // pred_check_branch
      %41 = sbr.rel (0) target = $region13
    $region12: #{tpu_custom_call.1} parent=1 // pred_region
      _
    $region13: #{tpu_custom_call.1} parent=1 // pred_fallthru
      _
    // Predicated region
    $region14: #{tpu_custom_call.1} parent=1 // pred_check
      _
    $region15: #{tpu_custom_call.1} parent=1 // pred_check_branch
      %43 = sbr.rel (0) target = $region17
    $region16: #{tpu_custom_call.1} parent=1 // pred_region
      %45 = vsyncadd [#allocation6], 0
      %s46 = sshll.u32 %s3, 4
      %s47 = int_to_ptr.hbm [resolvable:$true] %s46
      %s48 = sshll.u32 [#allocation7], 4
      %s49 = int_to_ptr.vmem [resolvable:$true] %s48
      %54 = dma.hbm_to_vmem [thread:$0]  %s47, 1024, %s49, [#allocation6], 64, 64, 4
    $region17: #{tpu_custom_call.1} parent=1 // pred_fallthru
      _
    // Predicated region
    $region18: #{tpu_custom_call.1} parent=1 // pred_check
      _
    $region19: #{tpu_custom_call.1} parent=1 // pred_check_branch
      %56 = sbr.rel (0) target = $region21
    $region20: #{tpu_custom_call.1} parent=1 // pred_region
      _
    $region21: #{tpu_custom_call.1} parent=1 // pred_fallthru
      _
    // Predicated region
    $region22: #{tpu_custom_call.1} parent=1 // pred_check
      _
    $region23: #{tpu_custom_call.1} parent=1 // pred_check_branch
      %58 = sbr.rel (0) target = $region25
    $region24: #{tpu_custom_call.1} parent=1 // pred_region
      %60 = vsyncadd [#allocation9], 0
      %s61 = sshll.u32 %s5, 4
      %s62 = int_to_ptr.hbm [resolvable:$true] %s61
      %s63 = sshll.u32 [#allocation8], 4
      %s64 = int_to_ptr.vmem [resolvable:$true] %s63
      %69 = dma.hbm_to_vmem [thread:$0]  %s62, 2048, %s64, [#allocation9], 128, 128, 8
    $region25: #{tpu_custom_call.1} parent=1 // pred_fallthru
      _
    // Predicated region
    $region26: #{tpu_custom_call.1} parent=1 // pred_check
      _
    $region27: #{tpu_custom_call.1} parent=1 // pred_check_branch
      %71 = sbr.rel (0) target = $region29
    $region28: #{tpu_custom_call.1} parent=1 // pred_region
      _
    $region29: #{tpu_custom_call.1} parent=1 // pred_fallthru
      _
    // Predicated region
    $region30: #{tpu_custom_call.1} parent=1 // pred_check
      _
    $region31: #{tpu_custom_call.1} parent=1 // pred_check_branch
      %73 = sbr.rel (0) target = $region33
    $region32: #{tpu_custom_call.1} parent=1 // pred_region
      %75 = dma.done [#allocation3], 64
    $region33: #{tpu_custom_call.1} parent=1 // pred_fallthru
      _
    // Predicated region
    $region34: #{tpu_custom_call.1} parent=1 // pred_check
      _
    $region35: #{tpu_custom_call.1} parent=1 // pred_check_branch
      %77 = sbr.rel (0) target = $region37
    $region36: #{tpu_custom_call.1} parent=1 // pred_region
      %79 = dma.done [#allocation6], 1024
    $region37: #{tpu_custom_call.1} parent=1 // pred_fallthru
      _
    // Predicated region
    $region38: #{tpu_custom_call.1} parent=1 // pred_check
      _
    $region39: #{tpu_custom_call.1} parent=1 // pred_check_branch
      %81 = sbr.rel (0) target = $region41
    $region40: #{tpu_custom_call.1} parent=1 // pred_region
      %83 = dma.done [#allocation6], 1024
    $region41: #{tpu_custom_call.1} parent=1 // pred_fallthru
      _
    // Predicated region
    $region42: #{tpu_custom_call.1} parent=1 // pred_check
      _
    $region43: #{tpu_custom_call.1} parent=1 // pred_check_branch
      %85 = sbr.rel (0) target = $region45
    $region44: #{tpu_custom_call.1} parent=1 // pred_region
      %87 = dma.done [#allocation9], 2048
    $region45: #{tpu_custom_call.1} parent=1 // pred_fallthru
      _
    %v88 = vld [vmem:[#allocation2] sm:$0xf]
    %v89 = vld [vmem:[#allocation5] sm:$0xf]
    %v90 = vld [vmem:[#allocation5 + $0x4] sm:$0xf]
    %v91 = vld [vmem:[#allocation5 + $0x8] sm:$0xf]
    %v92 = vld [vmem:[#allocation5 + $0xc] sm:$0xf]
    %v93 = vld [vmem:[#allocation5 + $0x10] sm:$0xf]
    %v94 = vld [vmem:[#allocation5 + $0x14] sm:$0xf]
    %v95 = vld [vmem:[#allocation5 + $0x18] sm:$0xf]
    %v96 = vld [vmem:[#allocation5 + $0x1c] sm:$0xf]
    %v97 = vld [vmem:[#allocation5 + $0x20] sm:$0xf]
    %v98 = vld [vmem:[#allocation5 + $0x24] sm:$0xf]
    %v99 = vld [vmem:[#allocation5 + $0x28] sm:$0xf]
    %v100 = vld [vmem:[#allocation5 + $0x2c] sm:$0xf]
    %v101 = vld [vmem:[#allocation5 + $0x30] sm:$0xf]
    %v102 = vld [vmem:[#allocation5 + $0x34] sm:$0xf]
    %v103 = vld [vmem:[#allocation5 + $0x38] sm:$0xf]
    %v104 = vld [vmem:[#allocation5 + $0x3c] sm:$0xf]
    %v105 = vld [vmem:[%s2] sm:$0x1]
    %v107 = vperm.slane %v105, 0
    %v125 = vunpack.c.l.b16 %v89
    %v126 = vunpack.c.l.b16 %v90
    %v127 = vunpack.c.l.b16 %v91
    %v128 = vunpack.c.l.b16 %v92
    %v129 = vunpack.c.l.b16 %v93
    %v130 = vunpack.c.l.b16 %v94
    %v131 = vunpack.c.l.b16 %v95
    %v132 = vunpack.c.l.b16 %v96
    %v133 = vunpack.c.l.b16 %v97
    %v134 = vunpack.c.l.b16 %v98
    %v135 = vunpack.c.l.b16 %v99
    %v136 = vunpack.c.l.b16 %v100
    %v137 = vunpack.c.l.b16 %v101
    %v138 = vunpack.c.l.b16 %v102
    %v139 = vunpack.c.l.b16 %v103
    %v140 = vunpack.c.l.b16 %v104
    %v141 = vpack.c.b16 %v126, %v125
    %v142 = vpack.c.b16 %v128, %v127
    %v143 = vpack.c.b16 %v130, %v129
    %v144 = vpack.c.b16 %v132, %v131
    %v145 = vpack.c.b16 %v134, %v133
    %v146 = vpack.c.b16 %v136, %v135
    %v147 = vpack.c.b16 %v138, %v137
    %v148 = vpack.c.b16 %v140, %v139
    %157 = vmatpush.bf16.msra.mxu0 %v148
    %158 = vmatpush.bf16.msra.mxu0 %v147
    %159 = vmatpush.bf16.msra.mxu0 %v146
    %160 = vmatpush.bf16.msra.mxu0 %v145
    %161 = vmatpush.bf16.msra.mxu0 %v144
    %162 = vmatpush.bf16.msra.mxu0 %v143
    %163 = vmatpush.bf16.msra.mxu0 %v142
    %164 = vmatpush.bf16.msra.mxu0 %v141
    %165 = vmatmul.bf16.gmra.mxu0 %v88
    %v166 = vpop.f32.mrf.mxu0
    %v167 = vadd.f32 %v107, %v166
    %v168 = vpop.f32.mrf.mxu0
    %169 = vdwg.mxu0
    %v170 = vmax.f32 %v167, 0.0
    %v171 = vpack.c.bf16 %v170, %v170
    %v172 = vld [vmem:[#allocation7] sm:$0xf]
    %v173 = vld [vmem:[#allocation7 + $0x4] sm:$0xf]
    %v174 = vld [vmem:[#allocation7 + $0x8] sm:$0xf]
    %v175 = vld [vmem:[#allocation7 + $0xc] sm:$0xf]
    %v176 = vld [vmem:[#allocation7 + $0x10] sm:$0xf]
    %v177 = vld [vmem:[#allocation7 + $0x14] sm:$0xf]
    %v178 = vld [vmem:[#allocation7 + $0x18] sm:$0xf]
    %v179 = vld [vmem:[#allocation7 + $0x1c] sm:$0xf]
    %v180 = vld [vmem:[#allocation7 + $0x20] sm:$0xf]
    %v181 = vld [vmem:[#allocation7 + $0x24] sm:$0xf]
    %v182 = vld [vmem:[#allocation7 + $0x28] sm:$0xf]
    %v183 = vld [vmem:[#allocation7 + $0x2c] sm:$0xf]
    %v184 = vld [vmem:[#allocation7 + $0x30] sm:$0xf]
    %v185 = vld [vmem:[#allocation7 + $0x34] sm:$0xf]
    %v186 = vld [vmem:[#allocation7 + $0x38] sm:$0xf]
    %v187 = vld [vmem:[#allocation7 + $0x3c] sm:$0xf]
    %v188 = vld [vmem:[%s4] sm:$0x1]
    %v190 = vperm.slane %v188, 0
    %v208 = vunpack.c.l.b16 %v172
    %v209 = vunpack.c.l.b16 %v173
    %v210 = vunpack.c.l.b16 %v174
    %v211 = vunpack.c.l.b16 %v175
    %v212 = vunpack.c.l.b16 %v176
    %v213 = vunpack.c.l.b16 %v177
    %v214 = vunpack.c.l.b16 %v178
    %v215 = vunpack.c.l.b16 %v179
    %v216 = vunpack.c.l.b16 %v180
    %v217 = vunpack.c.l.b16 %v181
    %v218 = vunpack.c.l.b16 %v182
    %v219 = vunpack.c.l.b16 %v183
    %v220 = vunpack.c.l.b16 %v184
    %v221 = vunpack.c.l.b16 %v185
    %v222 = vunpack.c.l.b16 %v186
    %v223 = vunpack.c.l.b16 %v187
    %v224 = vpack.c.b16 %v209, %v208
    %v225 = vpack.c.b16 %v211, %v210
    %v226 = vpack.c.b16 %v213, %v212
    %v227 = vpack.c.b16 %v215, %v214
    %v228 = vpack.c.b16 %v217, %v216
    %v229 = vpack.c.b16 %v219, %v218
    %v230 = vpack.c.b16 %v221, %v220
    %v231 = vpack.c.b16 %v223, %v222
    %240 = vmatpush.bf16.msra.mxu0 %v231
    %241 = vmatpush.bf16.msra.mxu0 %v230
    %242 = vmatpush.bf16.msra.mxu0 %v229
    %243 = vmatpush.bf16.msra.mxu0 %v228
    %244 = vmatpush.bf16.msra.mxu0 %v227
    %245 = vmatpush.bf16.msra.mxu0 %v226
    %246 = vmatpush.bf16.msra.mxu0 %v225
    %247 = vmatpush.bf16.msra.mxu0 %v224
    %248 = vmatmul.bf16.gmra.mxu0 %v171
    %v249 = vpop.f32.mrf.mxu0
    %v250 = vadd.f32 %v190, %v249
    %v251 = vpop.f32.mrf.mxu0
    %252 = vdwg.mxu0
    %v253 = vmax.f32 %v250, 0.0
    %v254 = vld [vmem:[#allocation8] sm:$0xff]
    %v255 = vld [vmem:[#allocation8 + $0x8] sm:$0xff]
    %v256 = vld [vmem:[#allocation8 + $0x10] sm:$0xff]
    %v257 = vld [vmem:[#allocation8 + $0x18] sm:$0xff]
    %v258 = vld [vmem:[#allocation8 + $0x20] sm:$0xff]
    %v259 = vld [vmem:[#allocation8 + $0x28] sm:$0xff]
    %v260 = vld [vmem:[#allocation8 + $0x30] sm:$0xff]
    %v261 = vld [vmem:[#allocation8 + $0x38] sm:$0xff]
    %v262 = vld [vmem:[#allocation8 + $0x40] sm:$0xff]
    %v263 = vld [vmem:[#allocation8 + $0x48] sm:$0xff]
    %v264 = vld [vmem:[#allocation8 + $0x50] sm:$0xff]
    %v265 = vld [vmem:[#allocation8 + $0x58] sm:$0xff]
    %v266 = vld [vmem:[#allocation8 + $0x60] sm:$0xff]
    %v267 = vld [vmem:[#allocation8 + $0x68] sm:$0xff]
    %v268 = vld [vmem:[#allocation8 + $0x70] sm:$0xff]
    %v269 = vld [vmem:[#allocation8 + $0x78] sm:$0xff]
    %v270 = vld [vmem:[%s6] sm:$0x1]
    %v272 = vperm.slane %v270, 0
    %274 = vmatpush.msra.mxu0 %v269
    %275 = vmatpush.msra.mxu0 %v268
    %276 = vmatpush.msra.mxu0 %v267
    %277 = vmatpush.msra.mxu0 %v266
    %278 = vmatpush.msra.mxu0 %v265
    %279 = vmatpush.msra.mxu0 %v264
    %280 = vmatpush.msra.mxu0 %v263
    %281 = vmatpush.msra.mxu0 %v262
    %282 = vmatpush.msra.mxu0 %v261
    %283 = vmatpush.msra.mxu0 %v260
    %284 = vmatpush.msra.mxu0 %v259
    %285 = vmatpush.msra.mxu0 %v258
    %286 = vmatpush.msra.mxu0 %v257
    %287 = vmatpush.msra.mxu0 %v256
    %288 = vmatpush.msra.mxu0 %v255
    %289 = vmatpush.msra.mxu0 %v254
    %290 = vmatmul.f32.gmra.mxu0 %v253
    %v291 = vpop.f32.mrf.mxu0
    %v292 = vadd.f32 %v272, %v291
    %293 = vdwg.mxu0
    %v294 = vtanh.pop %v292
    %295 = vst [vmem:[#allocation10] sm:$0xff] %v294
    // Predicated region
    $region46: #{tpu_custom_call.1} parent=1 // pred_check
      _
    $region47: #{tpu_custom_call.1} parent=1 // pred_check_branch
      %297 = sbr.rel (0) target = $region49
    $region48: #{tpu_custom_call.1} parent=1 // pred_region
      %299 = vsyncadd [#allocation4], 0
      %s301 = sshll.u32 [#allocation10], 4
      %s302 = int_to_ptr.vmem [resolvable:$true] %s301
      %s303 = sshll.u32 %s7, 4
      %s304 = int_to_ptr.hbm [resolvable:$true] %s303
      %306 = dma.vmem_to_hbm [thread:$0]  %s302, 128, %s304, [#allocation4]
    $region49: #{tpu_custom_call.1} parent=1 // pred_fallthru
      _
    // Predicated region
    $region50: #{tpu_custom_call.1} parent=1 // pred_check
      _
    $region51: #{tpu_custom_call.1} parent=1 // pred_check_branch
      %308 = sbr.rel (0) target = $region53
    $region52: #{tpu_custom_call.1} parent=1 // pred_region
      %310 = dma.done [#allocation4], 128
    $region53: #{tpu_custom_call.1} parent=1 // pred_fallthru
      _
    %311 = vsyncpa [#allocation3], 1
    %312 = vsyncpa [#allocation6], 1
    %313 = vsyncpa [#allocation9], 1
    %314 = vsyncpa [#allocation4], 1

// kernel: tpu_custom_call.1
$region0: #{tpu_custom_call.1}
  #allocation0 [shape = 'u32[]', space=smem, size = 0x4, offset = 0x4, fixed_abs, tag = 'smem constant byte address 0x4 - core index']
  #allocation1 [shape = 'u32[72,128]{1,0:T(1,128)}', space=vmem, size = 0x9000, scoped, tag = 'internal scratch']
  %s0 = inlined_call_operand.hbm [shape: bf16[8,128], index: 0, kind: input, shape index: {}]
  %s1 = inlined_call_operand.hbm [shape: bf16[128,128], index: 1, kind: input, shape index: {}]
  %s2 = inlined_call_operand.vmem [shape: f32[1,128], index: 2, kind: input, shape index: {}]
  %s3 = inlined_call_operand.hbm [shape: bf16[128,128], index: 3, kind: input, shape index: {}]
  %s4 = inlined_call_operand.vmem [shape: f32[1,128], index: 4, kind: input, shape index: {}]
  %s5 = inlined_call_operand.hbm [shape: f32[128,128], index: 5, kind: input, shape index: {}]
  %s6 = inlined_call_operand.vmem [shape: f32[1,128], index: 6, kind: input, shape index: {}]
  %s7 = inlined_call_operand.hbm [shape: f32[8,128], index: 7, kind: output, shape index: {}]
  %s8 = sld [smem:[#allocation0]]
  $region54: #{tpu_custom_call.1} parent=0
    _
  %s10 = ssub.s32 1, %s8
  %s11 = scalar_select 0, %s10, %s8
  $region1: #{tpu_custom_call.1} parent=0
    #allocation2 [shape = 'u8[2048]{0}', space=vmem, size = 0x800, scoped, tag = 'input window, operand 0, single buffered']
    #allocation3 [shape = 's32[1]{0}', space=sflag, size = 0x4, scoped, tag = 'scoped memory for tpu_custom_call.1']
    #allocation4 [shape = 's32[1]{0}', space=sflag, size = 0x4, scoped, tag = 'scoped memory for tpu_custom_call.1']
    #allocation5 [shape = 'u8[32768]{0}', space=vmem, size = 0x8000, scoped, tag = 'input window, operand 1, single buffered']
    #allocation6 [shape = 's32[1]{0}', space=sflag, size = 0x4, scoped, tag = 'scoped memory for tpu_custom_call.1']
    #allocation7 [shape = 'u8[32768]{0}', space=vmem, size = 0x8000, scoped, tag = 'input window, operand 3, single buffered']
    #allocation8 [shape = 'u8[65536]{0}', space=vmem, size = 0x10000, scoped, tag = 'input window, operand 5, single buffered']
    #allocation9 [shape = 's32[1]{0}', space=sflag, size = 0x4, scoped, tag = 'scoped memory for tpu_custom_call.1']
    #allocation10 [shape = 'u8[4096]{0}', space=vmem, size = 0x1000, scoped, tag = 'output window, operand 0, single buffered']
    %12 = vsyncpa [#allocation3], 0
    %13 = vsyncpa [#allocation6], 0
    %14 = vsyncpa [#allocation9], 0
    %15 = vsyncpa [#allocation4], 0
    // Predicated region
    $region2: #{tpu_custom_call.1} parent=1 // pred_check
      _
    $region3: #{tpu_custom_call.1} parent=1 // pred_check_branch
      %17 = sbr.rel (0) target = $region5
    $region4: #{tpu_custom_call.1} parent=1 // pred_region
      %19 = vsyncadd [#allocation3], 0
      %s21 = sshll.u32 %s0, 4
      %s22 = int_to_ptr.hbm [resolvable:$true] %s21
      %s23 = sshll.u32 [#allocation2], 4
      %s24 = int_to_ptr.vmem [resolvable:$true] %s23
      %26 = dma.hbm_to_vmem [thread:$0]  %s22, 64, %s24, [#allocation3]
    $region5: #{tpu_custom_call.1} parent=1 // pred_fallthru
      _
    // Predicated region
    $region6: #{tpu_custom_call.1} parent=1 // pred_check
      _
    $region7: #{tpu_custom_call.1} parent=1 // pred_check_branch
      %28 = sbr.rel (0) target = $region9
    $region8: #{tpu_custom_call.1} parent=1 // pred_region
      %30 = vsyncadd [#allocation6], 0
      %s31 = sshll.u32 %s1, 4
      %s32 = int_to_ptr.hbm [resolvable:$true] %s31
      %s33 = sshll.u32 [#allocation5], 4
      %s34 = int_to_ptr.vmem [resolvable:$true] %s33
      %39 = dma.hbm_to_vmem [thread:$0]  %s32, 1024, %s34, [#allocation6], 64, 64, 4
    $region9: #{tpu_custom_call.1} parent=1 // pred_fallthru
      _
    // Predicated region
    $region10: #{tpu_custom_call.1} parent=1 // pred_check
      _
    $region11: #{tpu_custom_call.1} parent=1 // pred_check_branch
      %41 = sbr.rel (0) target = $region13
    $region12: #{tpu_custom_call.1} parent=1 // pred_region
      _
    $region13: #{tpu_custom_call.1} parent=1 // pred_fallthru
      _
    // Predicated region
    $region14: #{tpu_custom_call.1} parent=1 // pred_check
      _
    $region15: #{tpu_custom_call.1} parent=1 // pred_check_branch
      %43 = sbr.rel (0) target = $region17
    $region16: #{tpu_custom_call.1} parent=1 // pred_region
      %45 = vsyncadd [#allocation6], 0
      %s46 = sshll.u32 %s3, 4
      %s47 = int_to_ptr.hbm [resolvable:$true] %s46
      %s48 = sshll.u32 [#allocation7], 4
      %s49 = int_to_ptr.vmem [resolvable:$true] %s48
      %54 = dma.hbm_to_vmem [thread:$0]  %s47, 1024, %s49, [#allocation6], 64, 64, 4
    $region17: #{tpu_custom_call.1} parent=1 // pred_fallthru
      _
    // Predicated region
    $region18: #{tpu_custom_call.1} parent=1 // pred_check
      _
    $region19: #{tpu_custom_call.1} parent=1 // pred_check_branch
      %56 = sbr.rel (0) target = $region21
    $region20: #{tpu_custom_call.1} parent=1 // pred_region
      _
    $region21: #{tpu_custom_call.1} parent=1 // pred_fallthru
      _
    // Predicated region
    $region22: #{tpu_custom_call.1} parent=1 // pred_check
      _
    $region23: #{tpu_custom_call.1} parent=1 // pred_check_branch
      %58 = sbr.rel (0) target = $region25
    $region24: #{tpu_custom_call.1} parent=1 // pred_region
      %60 = vsyncadd [#allocation9], 0
      %s61 = sshll.u32 %s5, 4
      %s62 = int_to_ptr.hbm [resolvable:$true] %s61
      %s63 = sshll.u32 [#allocation8], 4
      %s64 = int_to_ptr.vmem [resolvable:$true] %s63
      %69 = dma.hbm_to_vmem [thread:$0]  %s62, 2048, %s64, [#allocation9], 128, 128, 8
    $region25: #{tpu_custom_call.1} parent=1 // pred_fallthru
      _
    // Predicated region
    $region26: #{tpu_custom_call.1} parent=1 // pred_check
      _
    $region27: #{tpu_custom_call.1} parent=1 // pred_check_branch
      %71 = sbr.rel (0) target = $region29
    $region28: #{tpu_custom_call.1} parent=1 // pred_region
      _
    $region29: #{tpu_custom_call.1} parent=1 // pred_fallthru
      _
    // Predicated region
    $region30: #{tpu_custom_call.1} parent=1 // pred_check
      _
    $region31: #{tpu_custom_call.1} parent=1 // pred_check_branch
      %73 = sbr.rel (0) target = $region33
    $region32: #{tpu_custom_call.1} parent=1 // pred_region
      %75 = dma.done [#allocation3], 64
    $region33: #{tpu_custom_call.1} parent=1 // pred_fallthru
      _
    // Predicated region
    $region34: #{tpu_custom_call.1} parent=1 // pred_check
      _
    $region35: #{tpu_custom_call.1} parent=1 // pred_check_branch
      %77 = sbr.rel (0) target = $region37
    $region36: #{tpu_custom_call.1} parent=1 // pred_region
      %79 = dma.done [#allocation6], 1024
    $region37: #{tpu_custom_call.1} parent=1 // pred_fallthru
      _
    // Predicated region
    $region38: #{tpu_custom_call.1} parent=1 // pred_check
      _
    $region39: #{tpu_custom_call.1} parent=1 // pred_check_branch
      %81 = sbr.rel (0) target = $region41
    $region40: #{tpu_custom_call.1} parent=1 // pred_region
      %83 = dma.done [#allocation6], 1024
    $region41: #{tpu_custom_call.1} parent=1 // pred_fallthru
      _
    // Predicated region
    $region42: #{tpu_custom_call.1} parent=1 // pred_check
      _
    $region43: #{tpu_custom_call.1} parent=1 // pred_check_branch
      %85 = sbr.rel (0) target = $region45
    $region44: #{tpu_custom_call.1} parent=1 // pred_region
      %87 = dma.done [#allocation9], 2048
    $region45: #{tpu_custom_call.1} parent=1 // pred_fallthru
      _
    %v88 = vld [vmem:[#allocation2] sm:$0xf]
    %v89 = vld [vmem:[#allocation5] sm:$0xf]
    %v90 = vld [vmem:[#allocation5 + $0x4] sm:$0xf]
    %v91 = vld [vmem:[#allocation5 + $0x8] sm:$0xf]
    %v92 = vld [vmem:[#allocation5 + $0xc] sm:$0xf]
    %v93 = vld [vmem:[#allocation5 + $0x10] sm:$0xf]
    %v94 = vld [vmem:[#allocation5 + $0x14] sm:$0xf]
    %v95 = vld [vmem:[#allocation5 + $0x18] sm:$0xf]
    %v96 = vld [vmem:[#allocation5 + $0x1c] sm:$0xf]
    %v97 = vld [vmem:[#allocation5 + $0x20] sm:$0xf]
    %v98 = vld [vmem:[#allocation5 + $0x24] sm:$0xf]
    %v99 = vld [vmem:[#allocation5 + $0x28] sm:$0xf]
    %v100 = vld [vmem:[#allocation5 + $0x2c] sm:$0xf]
    %v101 = vld [vmem:[#allocation5 + $0x30] sm:$0xf]
    %v102 = vld [vmem:[#allocation5 + $0x34] sm:$0xf]
    %v103 = vld [vmem:[#allocation5 + $0x38] sm:$0xf]
    %v104 = vld [vmem:[#allocation5 + $0x3c] sm:$0xf]
    %v105 = vld [vmem:[%s2] sm:$0x1]
    %v107 = vperm.slane %v105, 0
    %v125 = vunpack.c.l.b16 %v89
    %v126 = vunpack.c.l.b16 %v90
    %v127 = vunpack.c.l.b16 %v91
    %v128 = vunpack.c.l.b16 %v92
    %v129 = vunpack.c.l.b16 %v93
    %v130 = vunpack.c.l.b16 %v94
    %v131 = vunpack.c.l.b16 %v95
    %v132 = vunpack.c.l.b16 %v96
    %v133 = vunpack.c.l.b16 %v97
    %v134 = vunpack.c.l.b16 %v98
    %v135 = vunpack.c.l.b16 %v99
    %v136 = vunpack.c.l.b16 %v100
    %v137 = vunpack.c.l.b16 %v101
    %v138 = vunpack.c.l.b16 %v102
    %v139 = vunpack.c.l.b16 %v103
    %v140 = vunpack.c.l.b16 %v104
    %v141 = vpack.c.b16 %v126, %v125
    %v142 = vpack.c.b16 %v128, %v127
    %v143 = vpack.c.b16 %v130, %v129
    %v144 = vpack.c.b16 %v132, %v131
    %v145 = vpack.c.b16 %v134, %v133
    %v146 = vpack.c.b16 %v136, %v135
    %v147 = vpack.c.b16 %v138, %v137
    %v148 = vpack.c.b16 %v140, %v139
    %157 = vmatpush.bf16.msra.mxu0 %v148
    %158 = vmatpush.bf16.msra.mxu0 %v147
    %159 = vmatpush.bf16.msra.mxu0 %v146
    %160 = vmatpush.bf16.msra.mxu0 %v145
    %161 = vmatpush.bf16.msra.mxu0 %v144
    %162 = vmatpush.bf16.msra.mxu0 %v143
    %163 = vmatpush.bf16.msra.mxu0 %v142
    %164 = vmatpush.bf16.msra.mxu0 %v141
    %165 = vmatmul.bf16.gmra.mxu0 %v88
    %v166 = vpop.f32.mrf.mxu0
    %v167 = vadd.f32 %v107, %v166
    %v168 = vpop.f32.mrf.mxu0
    %169 = vdwg.mxu0
    %v170 = vmax.f32 %v167, 0.0
    %v171 = vpack.c.bf16 %v170, %v170
    %v172 = vld [vmem:[#allocation7] sm:$0xf]
    %v173 = vld [vmem:[#allocation7 + $0x4] sm:$0xf]
    %v174 = vld [vmem:[#allocation7 + $0x8] sm:$0xf]
    %v175 = vld [vmem:[#allocation7 + $0xc] sm:$0xf]
    %v176 = vld [vmem:[#allocation7 + $0x10] sm:$0xf]
    %v177 = vld [vmem:[#allocation7 + $0x14] sm:$0xf]
    %v178 = vld [vmem:[#allocation7 + $0x18] sm:$0xf]
    %v179 = vld [vmem:[#allocation7 + $0x1c] sm:$0xf]
    %v180 = vld [vmem:[#allocation7 + $0x20] sm:$0xf]
    %v181 = vld [vmem:[#allocation7 + $0x24] sm:$0xf]
    %v182 = vld [vmem:[#allocation7 + $0x28] sm:$0xf]
    %v183 = vld [vmem:[#allocation7 + $0x2c] sm:$0xf]
    %v184 = vld [vmem:[#allocation7 + $0x30] sm:$0xf]
    %v185 = vld [vmem:[#allocation7 + $0x34] sm:$0xf]
    %v186 = vld [vmem:[#allocation7 + $0x38] sm:$0xf]
    %v187 = vld [vmem:[#allocation7 + $0x3c] sm:$0xf]
    %v188 = vld [vmem:[%s4] sm:$0x1]
    %v190 = vperm.slane %v188, 0
    %v208 = vunpack.c.l.b16 %v172
    %v209 = vunpack.c.l.b16 %v173
    %v210 = vunpack.c.l.b16 %v174
    %v211 = vunpack.c.l.b16 %v175
    %v212 = vunpack.c.l.b16 %v176
    %v213 = vunpack.c.l.b16 %v177
    %v214 = vunpack.c.l.b16 %v178
    %v215 = vunpack.c.l.b16 %v179
    %v216 = vunpack.c.l.b16 %v180
    %v217 = vunpack.c.l.b16 %v181
    %v218 = vunpack.c.l.b16 %v182
    %v219 = vunpack.c.l.b16 %v183
    %v220 = vunpack.c.l.b16 %v184
    %v221 = vunpack.c.l.b16 %v185
    %v222 = vunpack.c.l.b16 %v186
    %v223 = vunpack.c.l.b16 %v187
    %v224 = vpack.c.b16 %v209, %v208
    %v225 = vpack.c.b16 %v211, %v210
    %v226 = vpack.c.b16 %v213, %v212
    %v227 = vpack.c.b16 %v215, %v214
    %v228 = vpack.c.b16 %v217, %v216
    %v229 = vpack.c.b16 %v219, %v218
    %v230 = vpack.c.b16 %v221, %v220
    %v231 = vpack.c.b16 %v223, %v222
    %240 = vmatpush.bf16.msra.mxu0 %v231
    %241 = vmatpush.bf16.msra.mxu0 %v230
    %242 = vmatpush.bf16.msra.mxu0 %v229
    %243 = vmatpush.bf16.msra.mxu0 %v228
    %244 = vmatpush.bf16.msra.mxu0 %v227
    %245 = vmatpush.bf16.msra.mxu0 %v226
    %246 = vmatpush.bf16.msra.mxu0 %v225
    %247 = vmatpush.bf16.msra.mxu0 %v224
    %248 = vmatmul.bf16.gmra.mxu0 %v171
    %v249 = vpop.f32.mrf.mxu0
    %v250 = vadd.f32 %v190, %v249
    %v251 = vpop.f32.mrf.mxu0
    %252 = vdwg.mxu0
    %v253 = vmax.f32 %v250, 0.0
    %v254 = vld [vmem:[#allocation8] sm:$0xff]
    %v255 = vld [vmem:[#allocation8 + $0x8] sm:$0xff]
    %v256 = vld [vmem:[#allocation8 + $0x10] sm:$0xff]
    %v257 = vld [vmem:[#allocation8 + $0x18] sm:$0xff]
    %v258 = vld [vmem:[#allocation8 + $0x20] sm:$0xff]
    %v259 = vld [vmem:[#allocation8 + $0x28] sm:$0xff]
    %v260 = vld [vmem:[#allocation8 + $0x30] sm:$0xff]
    %v261 = vld [vmem:[#allocation8 + $0x38] sm:$0xff]
    %v262 = vld [vmem:[#allocation8 + $0x40] sm:$0xff]
    %v263 = vld [vmem:[#allocation8 + $0x48] sm:$0xff]
    %v264 = vld [vmem:[#allocation8 + $0x50] sm:$0xff]
    %v265 = vld [vmem:[#allocation8 + $0x58] sm:$0xff]
    %v266 = vld [vmem:[#allocation8 + $0x60] sm:$0xff]
    %v267 = vld [vmem:[#allocation8 + $0x68] sm:$0xff]
    %v268 = vld [vmem:[#allocation8 + $0x70] sm:$0xff]
    %v269 = vld [vmem:[#allocation8 + $0x78] sm:$0xff]
    %v270 = vld [vmem:[%s6] sm:$0x1]
    %v272 = vperm.slane %v270, 0
    %274 = vmatpush.msra.mxu0 %v269
    %275 = vmatpush.msra.mxu0 %v268
    %276 = vmatpush.msra.mxu0 %v267
    %277 = vmatpush.msra.mxu0 %v266
    %278 = vmatpush.msra.mxu0 %v265
    %279 = vmatpush.msra.mxu0 %v264
    %280 = vmatpush.msra.mxu0 %v263
    %281 = vmatpush.msra.mxu0 %v262
    %282 = vmatpush.msra.mxu0 %v261
    %283 = vmatpush.msra.mxu0 %v260
    %284 = vmatpush.msra.mxu0 %v259
    %285 = vmatpush.msra.mxu0 %v258
    %286 = vmatpush.msra.mxu0 %v257
    %287 = vmatpush.msra.mxu0 %v256
    %288 = vmatpush.msra.mxu0 %v255
    %289 = vmatpush.msra.mxu0 %v254
    %290 = vmatmul.f32.gmra.mxu0 %v253
    %v291 = vpop.f32.mrf.mxu0
    %v292 = vadd.f32 %v272, %v291
    %293 = vdwg.mxu0
    %v294 = vtanh.pop %v292
    %295 = vst [vmem:[#allocation10] sm:$0xff] %v294
    // Predicated region
    $region46: #{tpu_custom_call.1} parent=1 // pred_check
      _
    $region47: #{tpu_custom_call.1} parent=1 // pred_check_branch
      %297 = sbr.rel (0) target = $region49
    $region48: #{tpu_custom_call.1} parent=1 // pred_region
      %299 = vsyncadd [#allocation4], 0
      %s301 = sshll.u32 [#allocation10], 4
      %s302 = int_to_ptr.vmem [resolvable:$true] %s301
      %s303 = sshll.u32 %s7, 4
      %s304 = int_to_ptr.hbm [resolvable:$true] %s303
      %306 = dma.vmem_to_hbm [thread:$0]  %s302, 128, %s304, [#allocation4]
    $region49: #{tpu_custom_call.1} parent=1 // pred_fallthru
      _
    // Predicated region
    $region50: #{tpu_custom_call.1} parent=1 // pred_check
      _
    $region51: #{tpu_custom_call.1} parent=1 // pred_check_branch
      %308 = sbr.rel (0) target = $region53
    $region52: #{tpu_custom_call.1} parent=1 // pred_region
      %310 = dma.done [#allocation4], 128
    $region53: #{tpu_custom_call.1} parent=1 // pred_fallthru
      _
    %311 = vsyncpa [#allocation3], 1
    %312 = vsyncpa [#allocation6], 1
    %313 = vsyncpa [#allocation9], 1
    %314 = vsyncpa [#allocation4], 1

</llo_original>
